<compile_context>
chip_gen: v5e
topology: v5e:2x2
jax: 0.10.0
libtpu: 0.0.40
codegen_flags: <defaults>
</compile_context>

<pallas_src>
import functools
import math

import jax
import jax.numpy as jnp
from jax.experimental import pallas as pl
from jax.experimental.pallas import tpu as pltpu


# ---------------------------------------------------------------------------
# Kernel
# ---------------------------------------------------------------------------
def _sage_kernel(adj_ref, hw_ref, h_dst_ref, w_self_ref, b_ref, o_ref,
                 acc_ref, *, apply_relu_normalize):
    """Grid = (row_tiles, k_tiles); k (source-node) axis is the reduction.

    adj_ref    : (tm, tk)     pre-normalized adjacency tile (dest-major)
    hw_ref     : (tk, O_pad)  precomputed neighbor projection  h @ W_neigh
    h_dst_ref  : (tm, F_pad)  destination-node features for this row tile
    w_self_ref : (F_pad, O_pad) self half of the linear weight (resident)
    b_ref      : (1, O_pad)   bias (resident, f32)
    o_ref      : (tm, O_pad)  output tile
    acc_ref    : (tm, O_pad)  f32 VMEM accumulator scratch
    """
    k = pl.program_id(1)

    @pl.when(k == 0)
    def _():
        acc_ref[...] = jnp.zeros_like(acc_ref)

    # Aggregate the pre-projected neighbor features:
    #   acc += adj_norm_tile @ (h @ W_neigh)_tile
    # (the row-wise mean normalization is folded into adj and commutes with
    #  the right-multiplication by W_neigh).
    acc_ref[...] += jnp.dot(adj_ref[...], hw_ref[...],
                            preferred_element_type=jnp.float32)

    @pl.when(k == pl.num_programs(1) - 1)
    def _():
        out = (acc_ref[...]
               + jnp.dot(h_dst_ref[...], w_self_ref[...],
                         preferred_element_type=jnp.float32)
               + b_ref[...])                                   # (tm, O_pad)
        if apply_relu_normalize:
            # Fused ReLU + F.normalize(p=2, dim=1, eps=1e-12).  Padded output
            # columns are exactly zero (zero-padded W/b), so they do not
            # perturb the row norms.
            out = jnp.maximum(out, 0.0)
            ssq = jnp.sum(out * out, axis=-1, keepdims=True)
            out = out * jax.lax.rsqrt(jnp.maximum(ssq, 1e-24))
        o_ref[...] = out.astype(o_ref.dtype)


# ---------------------------------------------------------------------------
# Helpers
# ---------------------------------------------------------------------------
def _round_up(x, m):
    return (x + m - 1) // m * m


def _pick_tile(n_pad, max_tile, quantum):
    """Largest multiple of `quantum` that divides n_pad and is <= max_tile."""
    t = max(quantum, (min(max_tile, n_pad) // quantum) * quantum)
    while n_pad % t:
        t -= quantum
    return t


def _vmem_estimate_bytes(tm, tk, f_pad, o_pad, compute_dtype, out_dtype):
    """Rough double-buffered VMEM footprint of one pallas_call."""
    c = jnp.dtype(compute_dtype).itemsize
    od = jnp.dtype(out_dtype).itemsize
    inputs = 2 * (tm * tk + tk * o_pad + tm * f_pad + f_pad * o_pad) * c
    inputs += 2 * o_pad * 4                       # bias (f32)
    outputs = 2 * tm * o_pad * od
    acc = tm * o_pad * 4
    return inputs + outputs + acc


# ---------------------------------------------------------------------------
# Per-layer wrapper
# ---------------------------------------------------------------------------
def weighted_mean_sage_layer(adj_p, h_p, w_linear, b_linear, *,
                             apply_relu_normalize=False,
                             compute_dtype=jnp.bfloat16,
                             out_dtype=None,
                             max_tm=512, max_tk=2048):
    """One WeightedMeanSAGELayer forward on pre-padded inputs.

    adj_p    : (N_pad, N_pad) dest-major adjacency, already mean-normalized,
               cast to compute_dtype and zero-padded (shared across layers).
    h_p      : (N_pad, F_pad) node features, rows (and possibly feature
               columns) zero-padded.  Extra feature columns must be zero.
    w_linear : (O, 2F) torch-convention Linear weight (F <= F_pad).
    b_linear : (O,)    Linear bias.
    returns  : (N_pad, O_pad) padded output (padded columns are zero).
    """
    n_pad = adj_p.shape[0]
    f_pad = h_p.shape[1]
    o, two_f = w_linear.shape
    f = two_f // 2
    assert adj_p.shape == (n_pad, n_pad)
    assert h_p.shape[0] == n_pad and f_pad >= f
    if out_dtype is None:
        out_dtype = compute_dtype

    o_pad = _round_up(o, 128)    # lane-dense output -> unmasked vst

    # Split the torch-layout (O, 2F) weight into kernel-layout (F, O) halves:
    # first half multiplies h (self), second half multiplies h_N (neighbors).
    # Zero-pad rows up to f_pad (padded h columns are zero, so padded weight
    # rows contribute nothing) and columns up to o_pad.
    w_self = jnp.transpose(w_linear[:, :f])
    w_neigh = jnp.transpose(w_linear[:, f:])
    w_self_p = jnp.pad(w_self.astype(compute_dtype),
                       ((0, f_pad - f), (0, o_pad - o)))
    w_neigh_p = jnp.pad(w_neigh.astype(compute_dtype),
                        ((0, f_pad - f), (0, o_pad - o)))
    b_p = jnp.pad(b_linear.astype(jnp.float32),
                  (0, o_pad - o)).reshape(1, o_pad)

    h_c = h_p.astype(compute_dtype)
    # Precompute the neighbor projection ONCE per layer (a single XLA matmul)
    # and stream (tk, O_pad) tiles of it, instead of re-fetching h and redoing
    # the (tk, F)@(F, O_pad) projection inside the kernel per row tile.
    hw_p = jnp.dot(h_c, w_neigh_p,
                   preferred_element_type=jnp.float32).astype(compute_dtype)

    # Tiling.  Big tiles (HBM-bound kernel, ~0.35 us fixed per-step cost);
    # 128-quantum rows keep bf16 blocks on native (16,128) tiles; keep at
    # least 2 row tiles when possible so the "parallel" axis can shard across
    # v7x's two TensorCores.
    tm_cap = max_tm if n_pad < 256 else min(max_tm, n_pad // 2)
    tm = _pick_tile(n_pad, tm_cap, 128)
    tk = _pick_tile(n_pad, max_tk, 128)
    grid = (n_pad // tm, n_pad // tk)

    compiler_kwargs = dict(dimension_semantics=("parallel", "arbitrary"))
    est = _vmem_estimate_bytes(tm, tk, f_pad, o_pad, compute_dtype, out_dtype)
    if est > 12 * 1024 * 1024:
        # Large tiles can exceed v5e's 16 MiB scoped-VMEM default; raise it
        # (stay well inside v7x's 64 MiB physical VMEM).
        compiler_kwargs["vmem_limit_bytes"] = int(min(est + (8 << 20), 60 << 20))

    kernel = functools.partial(_sage_kernel,
                               apply_relu_normalize=apply_relu_normalize)

    out_p = pl.pallas_call(
        kernel,
        out_shape=jax.ShapeDtypeStruct((n_pad, o_pad), out_dtype),
        grid_spec=pltpu.PrefetchScalarGridSpec(
            num_scalar_prefetch=0,
            grid=grid,
            in_specs=[
                pl.BlockSpec((tm, tk), lambda i, k: (i, k)),        # adj tile
                pl.BlockSpec((tk, o_pad), lambda i, k: (k, 0)),     # HW tile
                pl.BlockSpec((tm, f_pad), lambda i, k: (i, 0)),     # h (dest)
                pl.BlockSpec((f_pad, o_pad), lambda i, k: (0, 0)),  # W_self (resident)
                pl.BlockSpec((1, o_pad), lambda i, k: (0, 0)),      # bias (resident)
            ],
            out_specs=pl.BlockSpec((tm, o_pad), lambda i, k: (i, 0)),
            scratch_shapes=[pltpu.VMEM((tm, o_pad), jnp.float32)],
        ),
        compiler_params=pltpu.CompilerParams(**compiler_kwargs),
    )(adj_p, hw_p, h_c, w_self_p, b_p)

    return out_p


# ---------------------------------------------------------------------------
# Full model forward
# ---------------------------------------------------------------------------
def mean_sage_forward(adj_w, adj_m, h, params, *,
                      compute_dtype=jnp.bfloat16, max_tm=512, max_tk=2048):
    """Full MeanSAGE forward: stacked layers with ReLU + L2-normalize between.

    adj_w  : (N, N) dest-major edge-weight matrix (0 where no edge)
    adj_m  : (N, N) dest-major edge-existence mask
    h      : (N, in_feats) node features
    params : list of (w_linear (O, 2F), b_linear (O,)) per layer
    returns: (N, num_classes) float32
    """
    n = h.shape[0]
    n_pad = _round_up(n, 128)

    # Adjacency prep done ONCE and shared by every layer: the in-degree is the
    # edge-existence count from adj_m (not the nonzero count of adj_w); the
    # mean normalization is folded into the edge weights, then cast + pad.
    deg = jnp.sum(adj_m, axis=1, keepdims=True)
    adj_norm = adj_w / jnp.maximum(deg, 1.0)
    adj_p = jnp.pad(adj_norm.astype(compute_dtype),
                    ((0, n_pad - n), (0, n_pad - n)))

    # Activations stay row-padded (and, between layers, feature-padded)
    # across the whole stack; padded adjacency columns are zero, so the
    # garbage rows never feed back into real rows.
    h_p = jnp.pad(h, ((0, n_pad - n), (0, 0)))

    n_total = len(params)
    for idx, (w_lin, b_lin) in enumerate(params):
        last = idx == n_total - 1
        h_p = weighted_mean_sage_layer(
            adj_p, h_p, w_lin, b_lin,
            apply_relu_normalize=not last,
            compute_dtype=compute_dtype,
            # Intermediate activations are written in the compute dtype (bf16
            # on the fast path); only the last layer emits f32.
            out_dtype=jnp.float32 if last else compute_dtype,
            max_tm=max_tm, max_tk=max_tk)

    o_last = params[-1][0].shape[0]
    return h_p[:n, :o_last].astype(jnp.float32)


# ---------------------------------------------------------------------------
# Pure-JAX reference (faithful to the PyTorch/DGL module, all f32)
# ---------------------------------------------------------------------------
def _reference_model(adj_w, adj_m, h, params):
    deg = jnp.maximum(adj_m.sum(axis=1, keepdims=True), 1.0)
    n_total = len(params)
    for idx, (w_lin, b_lin) in enumerate(params):
        h_n = (adj_w @ h) / deg
        h_total = jnp.concatenate([h, h_n], axis=1)
        h_new = h_total @ w_lin.T + b_lin
        if idx != n_total - 1:
            h_new = jnp.maximum(h_new, 0.0)                      # ReLU
            norm = jnp.sqrt(jnp.sum(h_new * h_new, axis=1, keepdims=True))
            h_new = h_new / jnp.maximum(norm, 1e-12)             # F.normalize
        h = h_new
    return h


def _init_mean_sage_params(key, in_feats, h_feats, num_classes, n_layers):
    dims = ([(in_feats, h_feats)]
            + [(h_feats, h_feats)] * (n_layers - 1)
            + [(h_feats, num_classes)])
    params = []
    for fi, fo in dims:
        key, kw, kb = jax.random.split(key, 3)
        bound = 1.0 / math.sqrt(2 * fi)   # torch Linear(2*fi, fo) init bound
        w = jax.random.uniform(kw, (fo, 2 * fi), minval=-bound, maxval=bound,
                               dtype=jnp.float32)
        b = jax.random.uniform(kb, (fo,), minval=-bound, maxval=bound,
                               dtype=jnp.float32)
        params.append((w, b))
    return params


if __name__ == "__main__":
    key = jax.random.PRNGKey(0)
    k_h, k_edge, k_w, k_params = jax.random.split(key, 4)

    # Small synthetic graph / model.
    n_nodes = 256
    in_feats, h_feats, num_classes, n_layers = 32, 32, 8, 2   # -> 3 layers

    h = jax.random.normal(k_h, (n_nodes, in_feats), dtype=jnp.float32)

    # ~10% edge density, dest-major adjacency, no self loops.
    edge_prob = jax.random.uniform(k_edge, (n_nodes, n_nodes))
    adj_m = (edge_prob < 0.1).astype(jnp.float32)
    adj_m = adj_m * (1.0 - jnp.eye(n_nodes, dtype=jnp.float32))
    adj_w = adj_m * jax.random.uniform(k_w, (n_nodes, n_nodes),
                                       dtype=jnp.float32)

    params = _init_mean_sage_params(k_params, in_feats, h_feats, num_classes,
                                    n_layers)

    ref = _reference_model(adj_w, adj_m, h, params)

    # Small tile caps for the demo so the (rows, k) grid actually has multiple
    # steps on the 256-node graph (2x2 grid) and the accumulator / pl.when
    # init/finalize paths are exercised.  Production defaults are
    # max_tm=512 / max_tk=2048.
    demo_tiles = dict(max_tm=128, max_tk=128)

    # bf16 MXU path (the optimized configuration), demo tiles.
    out_bf16 = mean_sage_forward(adj_w, adj_m, h, params,
                                 compute_dtype=jnp.bfloat16, **demo_tiles)
    out_bf16 = jax.block_until_ready(out_bf16)

    # f32 path for a tight numerical check of the kernel structure.
    out_f32 = mean_sage_forward(adj_w, adj_m, h, params,
                                compute_dtype=jnp.float32, **demo_tiles)
    out_f32 = jax.block_until_ready(out_f32)

    # Production tile defaults (single k tile on this small graph, 2 row
    # tiles so the "parallel" axis can still split across TensorCores).
    out_default = mean_sage_forward(adj_w, adj_m, h, params,
                                    compute_dtype=jnp.bfloat16)
    out_default = jax.block_until_ready(out_default)

    assert out_bf16.shape == (n_nodes, num_classes)
    assert out_f32.shape == (n_nodes, num_classes)
    assert out_default.shape == (n_nodes, num_classes)
    assert jnp.allclose(out_f32, ref, atol=2e-4, rtol=2e-4), \
        "f32 kernel mismatch vs reference"
    assert jnp.allclose(out_bf16, ref, atol=7e-2, rtol=7e-2), \
        "bf16 kernel mismatch vs reference"
    assert jnp.allclose(out_default, ref, atol=7e-2, rtol=7e-2), \
        "bf16 (default tiles) kernel mismatch vs reference"

    print("KERNEL_OK")
</pallas_src>

<mosaic_0001>
module attributes {stable_mosaic.version = 11 : i64} {
  func.func @_sage_kernel(%arg0: i32, %arg1: i32, %arg2: memref<128x128xbf16, #tpu.memory_space<vmem>>, %arg3: memref<128x128xbf16, #tpu.memory_space<vmem>>, %arg4: memref<128x32xbf16, #tpu.memory_space<vmem>>, %arg5: memref<32x128xbf16, #tpu.memory_space<vmem>>, %arg6: memref<1x128xf32, #tpu.memory_space<vmem>>, %arg7: memref<128x128xbf16, #tpu.memory_space<vmem>>, %arg8: memref<128x128xf32, #tpu.memory_space<vmem>>) attributes {dimension_semantics = [#tpu.dimension_semantics<parallel>, #tpu.dimension_semantics<arbitrary>], iteration_bounds = array<i64: 2, 2>, scalar_prefetch = 0 : i64, scratch_operands = 1 : i64, tpu.core_type = #tpu.core_type<tc>, window_params = [{transform_indices = @transform_0, window_bounds = array<i64: 128, 128>}, {transform_indices = @transform_1, window_bounds = array<i64: 128, 128>}, {transform_indices = @transform_2, window_bounds = array<i64: 128, 32>}, {pipeline_mode = #tpu.pipeline_mode<synchronous>, transform_indices = @transform_3, window_bounds = array<i64: 32, 128>}, {pipeline_mode = #tpu.pipeline_mode<synchronous>, transform_indices = @transform_4, window_bounds = array<i64: 1, 128>}, {transform_indices = @transform_5, window_bounds = array<i64: 128, 128>}]} {
    %c0_i32 = arith.constant 0 : i32
    %0 = arith.cmpi eq, %arg1, %c0_i32 : i32
    %1 = arith.extui %0 : i1 to i32
    %c0_i32_0 = arith.constant 0 : i32
    %2 = arith.cmpi ne, %1, %c0_i32_0 : i32
    scf.if %2 {
      %cst_9 = arith.constant 0.000000e+00 : f32
      %12 = vector.broadcast %cst_9 : f32 to vector<128x128xf32>
      %c0_10 = arith.constant 0 : index
      %c0_11 = arith.constant 0 : index
      %13 = vector.load %arg8[%c0_10, %c0_11] : memref<128x128xf32, #tpu.memory_space<vmem>>, vector<128x128xf32>
      tpu.vector_store %arg8[%c0_10, %c0_11], %12 {strides = array<i32>} : memref<128x128xf32, #tpu.memory_space<vmem>>, vector<128x128xf32>,
    } else {
    }
    %c0 = arith.constant 0 : index
    %c0_1 = arith.constant 0 : index
    %3 = vector.load %arg8[%c0, %c0_1] : memref<128x128xf32, #tpu.memory_space<vmem>>, vector<128x128xf32>
    %c0_2 = arith.constant 0 : index
    %c0_3 = arith.constant 0 : index
    %4 = vector.load %arg2[%c0_2, %c0_3] : memref<128x128xbf16, #tpu.memory_space<vmem>>, vector<128x128xbf16>
    %c0_4 = arith.constant 0 : index
    %c0_5 = arith.constant 0 : index
    %5 = vector.load %arg3[%c0_4, %c0_5] : memref<128x128xbf16, #tpu.memory_space<vmem>>, vector<128x128xbf16>
    %cst = arith.constant dense<0.000000e+00> : vector<128x128xf32>
    %6 = tpu.matmul %4, %5, %cst {dimension_numbers = #tpu.dot_dimension_numbers<[1], [0], [0], [1], [0, 0, 1, 1], [], []>} : vector<128x128xbf16>, vector<128x128xbf16>, vector<128x128xf32> -> vector<128x128xf32>
    %7 = arith.addf %3, %6 : vector<128x128xf32>
    %c0_6 = arith.constant 0 : index
    %c0_7 = arith.constant 0 : index
    %8 = vector.load %arg8[%c0_6, %c0_7] : memref<128x128xf32, #tpu.memory_space<vmem>>, vector<128x128xf32>
    tpu.vector_store %arg8[%c0_6, %c0_7], %7 {strides = array<i32>} : memref<128x128xf32, #tpu.memory_space<vmem>>, vector<128x128xf32>,
    %c1_i32 = arith.constant 1 : i32
    %9 = arith.cmpi eq, %arg1, %c1_i32 : i32
    %10 = arith.extui %9 : i1 to i32
    %c0_i32_8 = arith.constant 0 : i32
    %11 = arith.cmpi ne, %10, %c0_i32_8 : i32
    scf.if %11 {
      %c0_9 = arith.constant 0 : index
      %c0_10 = arith.constant 0 : index
      %12 = vector.load %arg8[%c0_9, %c0_10] : memref<128x128xf32, #tpu.memory_space<vmem>>, vector<128x128xf32>
      %c0_11 = arith.constant 0 : index
      %c0_12 = arith.constant 0 : index
      %13 = vector.load %arg4[%c0_11, %c0_12] : memref<128x32xbf16, #tpu.memory_space<vmem>>, vector<128x32xbf16>
      %c0_13 = arith.constant 0 : index
      %c0_14 = arith.constant 0 : index
      %14 = vector.load %arg5[%c0_13, %c0_14] : memref<32x128xbf16, #tpu.memory_space<vmem>>, vector<32x128xbf16>
      %cst_15 = arith.constant dense<0.000000e+00> : vector<128x128xf32>
      %15 = tpu.matmul %13, %14, %cst_15 {dimension_numbers = #tpu.dot_dimension_numbers<[1], [0], [0], [1], [0, 0, 1, 1], [], []>} : vector<128x32xbf16>, vector<32x128xbf16>, vector<128x128xf32> -> vector<128x128xf32>
      %16 = arith.addf %12, %15 : vector<128x128xf32>
      %c0_16 = arith.constant 0 : index
      %c0_17 = arith.constant 0 : index
      %17 = vector.load %arg6[%c0_16, %c0_17] : memref<1x128xf32, #tpu.memory_space<vmem>>, vector<1x128xf32>
      %18 = vector.broadcast %17 : vector<1x128xf32> to vector<128x128xf32>
      %19 = arith.addf %16, %18 : vector<128x128xf32>
      %cst_18 = arith.constant 0.000000e+00 : f32
      %20 = vector.broadcast %cst_18 : f32 to vector<128x128xf32>
      %21 = arith.maximumf %19, %20 : vector<128x128xf32>
      %22 = arith.mulf %21, %21 : vector<128x128xf32>
      %cst_19 = arith.constant dense<0.000000e+00> : vector<128xf32>
      %23 = vector.multi_reduction <add>, %22, %cst_19 [1] : vector<128x128xf32> to vector<128xf32>
      %24 = vector.shape_cast %23 : vector<128xf32> to vector<128x1xf32>
      %cst_20 = arith.constant 1.000000e-24 : f32
      %25 = vector.broadcast %cst_20 : f32 to vector<128x1xf32>
      %26 = arith.maximumf %24, %25 : vector<128x1xf32>
      %27 = math.rsqrt %26 : vector<128x1xf32>
      %28 = vector.broadcast %27 : vector<128x1xf32> to vector<128x128xf32>
      %29 = arith.mulf %21, %28 : vector<128x128xf32>
      %30 = arith.truncf %29 : vector<128x128xf32> to vector<128x128xbf16>
      %c0_21 = arith.constant 0 : index
      %c0_22 = arith.constant 0 : index
      %31 = vector.load %arg7[%c0_21, %c0_22] : memref<128x128xbf16, #tpu.memory_space<vmem>>, vector<128x128xbf16>
      tpu.vector_store %arg7[%c0_21, %c0_22], %30 {strides = array<i32>} : memref<128x128xbf16, #tpu.memory_space<vmem>>, vector<128x128xbf16>,
    } else {
    }
    return
  }
  func.func @transform_0(%arg0: i32, %arg1: i32) -> (i32, i32) {
    %c0_i32 = arith.constant 0 : i32
    return %arg0, %arg1 : i32, i32
  }
  func.func @transform_1(%arg0: i32, %arg1: i32) -> (i32, i32) {
    %c0_i32 = arith.constant 0 : i32
    %c0_i32_0 = arith.constant 0 : i32
    return %arg1, %c0_i32 : i32, i32
  }
  func.func @transform_2(%arg0: i32, %arg1: i32) -> (i32, i32) {
    %c0_i32 = arith.constant 0 : i32
    %c0_i32_0 = arith.constant 0 : i32
    return %arg0, %c0_i32 : i32, i32
  }
  func.func @transform_3(%arg0: i32, %arg1: i32) -> (i32, i32) {
    %c0_i32 = arith.constant 0 : i32
    %c0_i32_0 = arith.constant 0 : i32
    %c0_i32_1 = arith.constant 0 : i32
    return %c0_i32, %c0_i32_0 : i32, i32
  }
  func.func @transform_4(%arg0: i32, %arg1: i32) -> (i32, i32) {
    %c0_i32 = arith.constant 0 : i32
    %c0_i32_0 = arith.constant 0 : i32
    %c0_i32_1 = arith.constant 0 : i32
    return %c0_i32, %c0_i32_0 : i32, i32
  }
  func.func @transform_5(%arg0: i32, %arg1: i32) -> (i32, i32) {
    %c0_i32 = arith.constant 0 : i32
    %c0_i32_0 = arith.constant 0 : i32
    return %arg0, %c0_i32 : i32, i32
  }
}

</mosaic_0001>

<llo_original>
// kernel: tpu_custom_call.1
$region0: #{tpu_custom_call.1}
  #allocation0 [shape = 'u32[]', space=smem, size = 0x4, offset = 0x4, fixed_abs, tag = 'smem constant byte address 0x4 - core index']
  #allocation1 [shape = 'u32[72,128]{1,0:T(1,128)}', space=vmem, size = 0x9000, scoped, tag = 'internal scratch']
  #allocation2 [shape = 'f32[128,128]{1,0:T(8,128)}', space=vmem, size = 0x10000, scoped, tag = 'scratch operand']
  %s0 = inlined_call_operand.hbm [shape: bf16[256,256], index: 0, kind: input, shape index: {}]
  %s1 = inlined_call_operand.vmem [shape: bf16[256,128], index: 1, kind: input, shape index: {}]
  %s2 = inlined_call_operand.vmem [shape: bf16[256,32], index: 2, kind: input, shape index: {}]
  %s3 = inlined_call_operand.vmem [shape: bf16[32,128], index: 3, kind: input, shape index: {}]
  %s4 = inlined_call_operand.vmem [shape: f32[1,128], index: 4, kind: input, shape index: {}]
  %s5 = inlined_call_operand.hbm [shape: bf16[256,128], index: 5, kind: output, shape index: {}]
  %s6 = sld [smem:[#allocation0]]
  $region65: #{tpu_custom_call.1} parent=0
    _
  %s8 = ssub.s32 1, %s6
  %s9 = scalar_select 0, %s8, %s6
  $region1: #{tpu_custom_call.1} parent=0
    #allocation3 [shape = 'u8[65536]{0}', space=vmem, size = 0x10000, scoped, tag = 'input window, operand 0']
    #allocation4 [shape = 's32[2]{0}', space=sflag, size = 0x8, scoped, tag = 'scoped memory for tpu_custom_call.1']
    #allocation5 [shape = 's32[2]{0}', space=sflag, size = 0x8, scoped, tag = 'scoped memory for tpu_custom_call.1']
    #allocation6 [shape = 'u8[65536]{0}', space=vmem, size = 0x10000, scoped, tag = 'output window, operand 0']
    %10 = vsyncpa [#allocation4], 0
    %s11 = scalar_lea.sflag [#allocation4], 1
    %12 = vsyncpa %s11, 0
    %13 = vsyncpa [#allocation5], 0
    %s14 = scalar_lea.sflag [#allocation5], 1
    %15 = vsyncpa %s14, 0
    loop: start=0, step=1, limit=6
    $region2: #{tpu_custom_call.1} parent=1 // loop_pre_header
      _
    $region3: #{tpu_custom_call.1} parent=1 // loop_header
      %s17 = sphi 0, %s21
      %p18 = scmp.ge.s32.totalorder %s17, 6
      %s24 = sphi 0, %s36
      %s25 = sphi 0, %s32
      %s26 = sphi 0, %s24
      %s27 = sphi 0, %s25
      %s28 = sphi 0, %s26
      %s29 = sphi 0, %s27
      %s41 = sphi 0, %s43
      %s44 = sphi 0, %s41
      %s45 = sphi 0, %s44
      %s61 = sphi 0, %s45
      %s67 = sphi 0, %s69
      %s70 = sphi 0, %s67
      %s71 = sphi 0, %s70
      %s87 = sphi 0, %s71
      %s93 = sphi 0, %s95
      %s96 = sphi 0, %s93
      %s97 = sphi 0, %s96
      %s113 = sphi 0, %s97
      %s117 = sphi 0, %s117
      %s119 = sphi 0, %s117
      %s120 = sphi 0, %s119
      %s134 = sphi 0, %s120
      %s138 = sphi 0, %s138
      %s140 = sphi 0, %s138
      %s141 = sphi 0, %s140
      %s155 = sphi 0, %s141
      %s161 = sphi 0, %s163
      %s164 = sphi 0, %s161
      %s165 = sphi 0, %s164
      %s181 = sphi 0, %s165
    $region4: #{tpu_custom_call.1} parent=1 // loop_header_branch
      %20 = sbr.rel (%p18) target = $region8
    $region5: #{tpu_custom_call.1} parent=1 // loop_body
      %s22 = ssub.s32 %s17, 1
      %s23 = ssub.s32 %s17, 2
      %s30 = sadd.s32 1, %s25
      %p31 = scmp.ge.s32.totalorder %s30, 2
      %s32 = scalar_select %p31, 0, %s30
      %s33 = sadd.s32 1, %s24
      %s34 = scalar_select %p31, %s33, %s24
      %p35 = scmp.ge.s32.totalorder %s34, 2
      %s36 = scalar_select %p35, 0, %s34
      %s37 = ssub.s32 %s24, %s36
      %s38 = ssub.s32 %s25, %s32
      %s39 = sor.u32 %s37, %s38
      %p40 = scmp.eq.s32.totalorder %s39, 0
      %s42 = sadd.s32 %s41, 1
      %s43 = scalar_select %p40, %s41, %s42
      %p46 = pneg %p40
      %p47 = scmp.eq.s32.totalorder %s17, 3
      %p48 = por %p46, %p47
      %p49 = scmp.ne.s32.totalorder %s41, %s44
      %p50 = scmp.eq.s32.totalorder %s17, 0
      %p51 = por %p49, %p50
      %p52 = scmp.ne.s32.totalorder %s41, %s44
      %p53 = scmp.eq.s32.totalorder %s22, 3
      %p54 = por %p52, %p53
      %p55 = scmp.ne.s32.totalorder %s44, %s45
      %p56 = scmp.eq.s32.totalorder %s22, 0
      %p57 = por %p55, %p56
      %p58 = scmp.ne.s32.totalorder %s44, %s45
      %p59 = scmp.eq.s32.totalorder %s23, 3
      %p60 = por %p58, %p59
      %p62 = scmp.ne.s32.totalorder %s45, %s61
      %p63 = scmp.eq.s32.totalorder %s23, 0
      %p64 = por %p62, %p63
      %s65 = ssub.s32 %s25, %s32
      %p66 = scmp.eq.s32.totalorder %s65, 0
      %s68 = sadd.s32 %s67, 1
      %s69 = scalar_select %p66, %s67, %s68
      %p72 = pneg %p66
      %p73 = scmp.eq.s32.totalorder %s17, 3
      %p74 = por %p72, %p73
      %p75 = scmp.ne.s32.totalorder %s67, %s70
      %p76 = scmp.eq.s32.totalorder %s17, 0
      %p77 = por %p75, %p76
      %p78 = scmp.ne.s32.totalorder %s67, %s70
      %p79 = scmp.eq.s32.totalorder %s22, 3
      %p80 = por %p78, %p79
      %p81 = scmp.ne.s32.totalorder %s70, %s71
      %p82 = scmp.eq.s32.totalorder %s22, 0
      %p83 = por %p81, %p82
      %p84 = scmp.ne.s32.totalorder %s70, %s71
      %p85 = scmp.eq.s32.totalorder %s23, 3
      %p86 = por %p84, %p85
      %p88 = scmp.ne.s32.totalorder %s71, %s87
      %p89 = scmp.eq.s32.totalorder %s23, 0
      %p90 = por %p88, %p89
      %s91 = ssub.s32 %s24, %s36
      %p92 = scmp.eq.s32.totalorder %s91, 0
      %s94 = sadd.s32 %s93, 1
      %s95 = scalar_select %p92, %s93, %s94
      %p98 = pneg %p92
      %p99 = scmp.eq.s32.totalorder %s17, 3
      %p100 = por %p98, %p99
      %p101 = scmp.ne.s32.totalorder %s93, %s96
      %p102 = scmp.eq.s32.totalorder %s17, 0
      %p103 = por %p101, %p102
      %p104 = scmp.ne.s32.totalorder %s93, %s96
      %p105 = scmp.eq.s32.totalorder %s22, 3
      %p106 = por %p104, %p105
      %p107 = scmp.ne.s32.totalorder %s96, %s97
      %p108 = scmp.eq.s32.totalorder %s22, 0
      %p109 = por %p107, %p108
      %p110 = scmp.ne.s32.totalorder %s96, %s97
      %p111 = scmp.eq.s32.totalorder %s23, 3
      %p112 = por %p110, %p111
      %p114 = scmp.ne.s32.totalorder %s97, %s113
      %p115 = scmp.eq.s32.totalorder %s23, 0
      %p116 = por %p114, %p115
      %s118 = sadd.s32 %s117, 1
      %p121 = scmp.eq.s32.totalorder %s17, 3
      %p122 = scmp.ne.s32.totalorder %s117, %s119
      %p123 = scmp.eq.s32.totalorder %s17, 0
      %p124 = por %p122, %p123
      %p125 = scmp.ne.s32.totalorder %s117, %s119
      %p126 = scmp.eq.s32.totalorder %s22, 3
      %p127 = por %p125, %p126
      %p128 = scmp.ne.s32.totalorder %s119, %s120
      %p129 = scmp.eq.s32.totalorder %s22, 0
      %p130 = por %p128, %p129
      %p131 = scmp.ne.s32.totalorder %s119, %s120
      %p132 = scmp.eq.s32.totalorder %s23, 3
      %p133 = por %p131, %p132
      %p135 = scmp.ne.s32.totalorder %s120, %s134
      %p136 = scmp.eq.s32.totalorder %s23, 0
      %p137 = por %p135, %p136
      %s139 = sadd.s32 %s138, 1
      %p142 = scmp.eq.s32.totalorder %s17, 3
      %p143 = scmp.ne.s32.totalorder %s138, %s140
      %p144 = scmp.eq.s32.totalorder %s17, 0
      %p145 = por %p143, %p144
      %p146 = scmp.ne.s32.totalorder %s138, %s140
      %p147 = scmp.eq.s32.totalorder %s22, 3
      %p148 = por %p146, %p147
      %p149 = scmp.ne.s32.totalorder %s140, %s141
      %p150 = scmp.eq.s32.totalorder %s22, 0
      %p151 = por %p149, %p150
      %p152 = scmp.ne.s32.totalorder %s140, %s141
      %p153 = scmp.eq.s32.totalorder %s23, 3
      %p154 = por %p152, %p153
      %p156 = scmp.ne.s32.totalorder %s141, %s155
      %p157 = scmp.eq.s32.totalorder %s23, 0
      %p158 = por %p156, %p157
      %s159 = ssub.s32 %s24, %s36
      %p160 = scmp.eq.s32.totalorder %s159, 0
      %s162 = sadd.s32 %s161, 1
      %s163 = scalar_select %p160, %s161, %s162
      %p166 = pneg %p160
      %p167 = scmp.eq.s32.totalorder %s17, 3
      %p168 = por %p166, %p167
      %p169 = scmp.ne.s32.totalorder %s161, %s164
      %p170 = scmp.eq.s32.totalorder %s17, 0
      %p171 = por %p169, %p170
      %p172 = scmp.ne.s32.totalorder %s161, %s164
      %p173 = scmp.eq.s32.totalorder %s22, 3
      %p174 = por %p172, %p173
      %p175 = scmp.ne.s32.totalorder %s164, %s165
      %p176 = scmp.eq.s32.totalorder %s22, 0
      %p177 = por %p175, %p176
      %p178 = scmp.ne.s32.totalorder %s164, %s165
      %p179 = scmp.eq.s32.totalorder %s23, 3
      %p180 = por %p178, %p179
      %p182 = scmp.ne.s32.totalorder %s165, %s181
      %p183 = scmp.eq.s32.totalorder %s23, 0
      %p184 = por %p182, %p183
      %p185 = scmp.le.s32.totalorder 1, %s17
      %p186 = scmp.lt.s32.totalorder %s17, 5
      %p187 = pnand %p185, %p186
      %p188 = pneg %p187
      // Predicated region
      $region9: #{tpu_custom_call.1} parent=5 // pred_check
        _
      $region10: #{tpu_custom_call.1} parent=5 // pred_check_branch
        %190 = sbr.rel (%p187) target = $region12
      $region11: #{tpu_custom_call.1} parent=5 // pred_region
        %s191 = ssub.s32 %s17, 1
        // Predicated region
        $region13: #{tpu_custom_call.1} parent=11 // pred_check
          %p192 = pneg %p130
        $region14: #{tpu_custom_call.1} parent=11 // pred_check_branch
          %194 = sbr.rel (%p192) target = $region16
        $region15: #{tpu_custom_call.1} parent=11 // pred_region
          _
        $region16: #{tpu_custom_call.1} parent=11 // pred_fallthru
          _
        // Predicated region
        $region17: #{tpu_custom_call.1} parent=11 // pred_check
          %p195 = pneg %p151
        $region18: #{tpu_custom_call.1} parent=11 // pred_check_branch
          %197 = sbr.rel (%p195) target = $region20
        $region19: #{tpu_custom_call.1} parent=11 // pred_region
          _
        $region20: #{tpu_custom_call.1} parent=11 // pred_fallthru
          _
      $region12: #{tpu_custom_call.1} parent=5 // pred_fallthru
        _
      %p198 = scmp.lt.s32.totalorder %s17, 4
      // Predicated region
      $region21: #{tpu_custom_call.1} parent=5 // pred_check
        %p199 = pneg %p198
      $region22: #{tpu_custom_call.1} parent=5 // pred_check_branch
        %201 = sbr.rel (%p199) target = $region24
      $region23: #{tpu_custom_call.1} parent=5 // pred_region
        // Predicated region
        $region25: #{tpu_custom_call.1} parent=23 // pred_check
          %p202 = pneg %p51
        $region26: #{tpu_custom_call.1} parent=23 // pred_check_branch
          %204 = sbr.rel (%p202) target = $region28
        $region27: #{tpu_custom_call.1} parent=23 // pred_region
          %s205 = sand.u32 %s41, 1
          %s206 = scalar_lea.sflag [#allocation4], %s205
          %s207 = sand.u32 %s41, 1
          %s208 = smul.addr %s207, 64
          %s209 = scalar_lea.vmem [#allocation3], %s208
          %s210 = smul.u32 16, %s24
          %212 = vsyncadd %s206, 0
          %s213 = smul.addr %s210, 2
          %s214 = sadd.s32 %s25, %s213
          %s215 = smul.addr %s214, 4
          %s216 = scalar_lea.hbm %s0, %s215
          %s217 = sshll.u32 %s216, 4
          %s218 = int_to_ptr.hbm [resolvable:$true] %s217
          %s219 = sshll.u32 %s209, 4
          %s220 = int_to_ptr.vmem [resolvable:$true] %s219
          %225 = dma.hbm_to_vmem [thread:$0]  %s218, 1024, %s220, %s206, 128, 64, 4
        $region28: #{tpu_custom_call.1} parent=23 // pred_fallthru
          _
        // Predicated region
        $region29: #{tpu_custom_call.1} parent=23 // pred_check
          %p226 = pneg %p77
        $region30: #{tpu_custom_call.1} parent=23 // pred_check_branch
          %228 = sbr.rel (%p226) target = $region32
        $region31: #{tpu_custom_call.1} parent=23 // pred_region
          %s229 = smul.u32 16, %s25
          %p230 = scmp.lt.s32.totalorder %s229, 31
          %s231 = scalar_select %p230, %s229, 31
          %s232 = smul.addr %s231, 4
          %s233 = scalar_lea.vmem %s1, %s232
          %s234 = smul.u32 16, %s25
        $region32: #{tpu_custom_call.1} parent=23 // pred_fallthru
          _
        // Predicated region
        $region33: #{tpu_custom_call.1} parent=23 // pred_check
          %p235 = pneg %p103
        $region34: #{tpu_custom_call.1} parent=23 // pred_check_branch
          %237 = sbr.rel (%p235) target = $region36
        $region35: #{tpu_custom_call.1} parent=23 // pred_region
          %s238 = smul.u32 16, %s24
          %p239 = scmp.lt.s32.totalorder %s238, 31
          %s240 = scalar_select %p239, %s238, 31
          %s241 = smul.addr %s240, 4
          %s242 = scalar_lea.vmem %s2, %s241
          %s243 = smul.u32 16, %s24
        $region36: #{tpu_custom_call.1} parent=23 // pred_fallthru
          _
      $region24: #{tpu_custom_call.1} parent=5 // pred_fallthru
        _
      %p244 = scmp.le.s32.totalorder 1, %s17
      %p245 = scmp.lt.s32.totalorder %s17, 5
      %p246 = pnand %p244, %p245
      %p247 = pneg %p246
      // Predicated region
      $region37: #{tpu_custom_call.1} parent=5 // pred_check
        _
      $region38: #{tpu_custom_call.1} parent=5 // pred_check_branch
        %249 = sbr.rel (%p246) target = $region40
      $region39: #{tpu_custom_call.1} parent=5 // pred_region
        %s250 = ssub.s32 %s17, 1
        %s251 = sand.u32 %s44, 1
        %s252 = scalar_lea.sflag [#allocation4], %s251
        %s253 = sand.u32 %s44, 1
        %s254 = smul.addr %s253, 64
        %s255 = scalar_lea.vmem [#allocation3], %s254
        // Predicated region
        $region41: #{tpu_custom_call.1} parent=39 // pred_check
          %p256 = pneg %p57
        $region42: #{tpu_custom_call.1} parent=39 // pred_check_branch
          %258 = sbr.rel (%p256) target = $region44
        $region43: #{tpu_custom_call.1} parent=39 // pred_region
          %260 = dma.done %s252, 1024
        $region44: #{tpu_custom_call.1} parent=39 // pred_fallthru
          _
        %s261 = sand.u32 %s44, 1
        %s262 = scalar_lea.sflag [#allocation4], %s261
        %s263 = sand.u32 %s44, 1
        %s264 = smul.addr %s263, 64
        %s265 = scalar_lea.vmem [#allocation3], %s264
        %p266 = pneg %p57
        %p267 = pneg %p54
        %s268 = smul.u32 16, %s27
        %p269 = scmp.lt.s32.totalorder %s268, 31
        %s270 = scalar_select %p269, %s268, 31
        %s271 = smul.addr %s270, 4
        %s272 = scalar_lea.vmem %s1, %s271
        %p273 = pneg %p83
        %p274 = pneg %p80
        %s275 = smul.u32 16, %s26
        %p276 = scmp.lt.s32.totalorder %s275, 31
        %s277 = scalar_select %p276, %s275, 31
        %s278 = smul.addr %s277, 4
        %s279 = scalar_lea.vmem %s2, %s278
        %p280 = pneg %p109
        %p281 = pneg %p106
        %p282 = pneg %p130
        %p283 = pneg %p127
        %p284 = pneg %p151
        %p285 = pneg %p148
        %p286 = pneg %p177
        %p287 = pneg %p174
        %s288 = sand.u32 %s164, 1
        %s289 = scalar_lea.sflag [#allocation5], %s288
        %s290 = sand.u32 %s164, 1
        %s291 = smul.addr %s290, 64
        %s292 = scalar_lea.vmem [#allocation6], %s291
        %s293 = smul.u32 16, %s26
        %s294 = smul.u32 16, %s27
        %p295 = scmp.lt.s32.totalorder %s294, 31
        %s296 = scalar_select %p295, %s294, 31
        %s297 = smul.addr %s296, 4
        %s298 = scalar_lea.vmem %s1, %s297
        %s299 = smul.u32 16, %s27
        %s300 = smul.u32 16, %s26
        %p301 = scmp.lt.s32.totalorder %s300, 31
        %s302 = scalar_select %p301, %s300, 31
        %s303 = smul.addr %s302, 4
        %s304 = scalar_lea.vmem %s2, %s303
        %s305 = smul.u32 16, %s26
        %s306 = smul.u32 16, %s26
        %p308 = scmp.eq.s32.totalorder %s27, 0
        // Predicated region
        $region45: #{tpu_custom_call.1} parent=39 // pred_check
          %p309 = pneg %p308
        $region46: #{tpu_custom_call.1} parent=39 // pred_check_branch
          %311 = sbr.rel (%p309) target = $region48
        $region47: #{tpu_custom_call.1} parent=39 // pred_region
          %312 = vst [vmem:[#allocation2] sm:$0xff] 0.0
          %313 = vst [vmem:[#allocation2 + $0x8] sm:$0xff] 0.0
          %314 = vst [vmem:[#allocation2 + $0x10] sm:$0xff] 0.0
          %315 = vst [vmem:[#allocation2 + $0x18] sm:$0xff] 0.0
          %316 = vst [vmem:[#allocation2 + $0x20] sm:$0xff] 0.0
          %317 = vst [vmem:[#allocation2 + $0x28] sm:$0xff] 0.0
          %318 = vst [vmem:[#allocation2 + $0x30] sm:$0xff] 0.0
          %319 = vst [vmem:[#allocation2 + $0x38] sm:$0xff] 0.0
          %320 = vst [vmem:[#allocation2 + $0x40] sm:$0xff] 0.0
          %321 = vst [vmem:[#allocation2 + $0x48] sm:$0xff] 0.0
          %322 = vst [vmem:[#allocation2 + $0x50] sm:$0xff] 0.0
          %323 = vst [vmem:[#allocation2 + $0x58] sm:$0xff] 0.0
          %324 = vst [vmem:[#allocation2 + $0x60] sm:$0xff] 0.0
          %325 = vst [vmem:[#allocation2 + $0x68] sm:$0xff] 0.0
          %326 = vst [vmem:[#allocation2 + $0x70] sm:$0xff] 0.0
          %327 = vst [vmem:[#allocation2 + $0x78] sm:$0xff] 0.0
        $region48: #{tpu_custom_call.1} parent=39 // pred_fallthru
          _
        %v328 = vld [vmem:[#allocation2] sm:$0xff]
        %v329 = vld [vmem:[#allocation2 + $0x8] sm:$0xff]
        %v330 = vld [vmem:[#allocation2 + $0x10] sm:$0xff]
        %v331 = vld [vmem:[#allocation2 + $0x18] sm:$0xff]
        %v332 = vld [vmem:[#allocation2 + $0x20] sm:$0xff]
        %v333 = vld [vmem:[#allocation2 + $0x28] sm:$0xff]
        %v334 = vld [vmem:[#allocation2 + $0x30] sm:$0xff]
        %v335 = vld [vmem:[#allocation2 + $0x38] sm:$0xff]
        %v336 = vld [vmem:[#allocation2 + $0x40] sm:$0xff]
        %v337 = vld [vmem:[#allocation2 + $0x48] sm:$0xff]
        %v338 = vld [vmem:[#allocation2 + $0x50] sm:$0xff]
        %v339 = vld [vmem:[#allocation2 + $0x58] sm:$0xff]
        %v340 = vld [vmem:[#allocation2 + $0x60] sm:$0xff]
        %v341 = vld [vmem:[#allocation2 + $0x68] sm:$0xff]
        %v342 = vld [vmem:[#allocation2 + $0x70] sm:$0xff]
        %v343 = vld [vmem:[#allocation2 + $0x78] sm:$0xff]
        %v344 = vld [vmem:[%s255] sm:$0xf]
        %v345 = vld [vmem:[%s255 + $0x4] sm:$0xf]
        %v346 = vld [vmem:[%s255 + $0x8] sm:$0xf]
        %v347 = vld [vmem:[%s255 + $0xc] sm:$0xf]
        %v348 = vld [vmem:[%s255 + $0x10] sm:$0xf]
        %v349 = vld [vmem:[%s255 + $0x14] sm:$0xf]
        %v350 = vld [vmem:[%s255 + $0x18] sm:$0xf]
        %v351 = vld [vmem:[%s255 + $0x1c] sm:$0xf]
        %v352 = vld [vmem:[%s255 + $0x20] sm:$0xf]
        %v353 = vld [vmem:[%s255 + $0x24] sm:$0xf]
        %v354 = vld [vmem:[%s255 + $0x28] sm:$0xf]
        %v355 = vld [vmem:[%s255 + $0x2c] sm:$0xf]
        %v356 = vld [vmem:[%s255 + $0x30] sm:$0xf]
        %v357 = vld [vmem:[%s255 + $0x34] sm:$0xf]
        %v358 = vld [vmem:[%s255 + $0x38] sm:$0xf]
        %v359 = vld [vmem:[%s255 + $0x3c] sm:$0xf]
        %v360 = vld [vmem:[%s298] sm:$0xf]
        %v361 = vld [vmem:[%s298 + $0x4] sm:$0xf]
        %v362 = vld [vmem:[%s298 + $0x8] sm:$0xf]
        %v363 = vld [vmem:[%s298 + $0xc] sm:$0xf]
        %v364 = vld [vmem:[%s298 + $0x10] sm:$0xf]
        %v365 = vld [vmem:[%s298 + $0x14] sm:$0xf]
        %v366 = vld [vmem:[%s298 + $0x18] sm:$0xf]
        %v367 = vld [vmem:[%s298 + $0x1c] sm:$0xf]
        %v368 = vld [vmem:[%s298 + $0x20] sm:$0xf]
        %v369 = vld [vmem:[%s298 + $0x24] sm:$0xf]
        %v370 = vld [vmem:[%s298 + $0x28] sm:$0xf]
        %v371 = vld [vmem:[%s298 + $0x2c] sm:$0xf]
        %v372 = vld [vmem:[%s298 + $0x30] sm:$0xf]
        %v373 = vld [vmem:[%s298 + $0x34] sm:$0xf]
        %v374 = vld [vmem:[%s298 + $0x38] sm:$0xf]
        %v375 = vld [vmem:[%s298 + $0x3c] sm:$0xf]
        %v392 = vunpack.c.l.b16 %v344
        %v393 = vunpack.c.l.b16 %v345
        %v394 = vunpack.c.l.b16 %v346
        %v395 = vunpack.c.l.b16 %v347
        %v396 = vunpack.c.l.b16 %v348
        %v397 = vunpack.c.l.b16 %v349
        %v398 = vunpack.c.l.b16 %v350
        %v399 = vunpack.c.l.b16 %v351
        %v400 = vunpack.c.l.b16 %v352
        %v401 = vunpack.c.l.b16 %v353
        %v402 = vunpack.c.l.b16 %v354
        %v403 = vunpack.c.l.b16 %v355
        %v404 = vunpack.c.l.b16 %v356
        %v405 = vunpack.c.l.b16 %v357
        %v406 = vunpack.c.l.b16 %v358
        %v407 = vunpack.c.l.b16 %v359
        %v408 = vpack.c.b16 %v393, %v392
        %v409 = vpack.c.b16 %v395, %v394
        %v410 = vpack.c.b16 %v397, %v396
        %v411 = vpack.c.b16 %v399, %v398
        %v412 = vpack.c.b16 %v401, %v400
        %v413 = vpack.c.b16 %v403, %v402
        %v414 = vpack.c.b16 %v405, %v404
        %v415 = vpack.c.b16 %v407, %v406
        %v440 = vunpack.c.l.b16 %v360
        %v441 = vunpack.c.l.b16 %v361
        %v442 = vunpack.c.l.b16 %v362
        %v443 = vunpack.c.l.b16 %v363
        %v444 = vunpack.c.l.b16 %v364
        %v445 = vunpack.c.l.b16 %v365
        %v446 = vunpack.c.l.b16 %v366
        %v447 = vunpack.c.l.b16 %v367
        %v448 = vunpack.c.l.b16 %v368
        %v449 = vunpack.c.l.b16 %v369
        %v450 = vunpack.c.l.b16 %v370
        %v451 = vunpack.c.l.b16 %v371
        %v452 = vunpack.c.l.b16 %v372
        %v453 = vunpack.c.l.b16 %v373
        %v454 = vunpack.c.l.b16 %v374
        %v455 = vunpack.c.l.b16 %v375
        %v456 = vpack.c.b16 %v441, %v440
        %v457 = vpack.c.b16 %v443, %v442
        %v458 = vpack.c.b16 %v445, %v444
        %v459 = vpack.c.b16 %v447, %v446
        %v460 = vpack.c.b16 %v449, %v448
        %v461 = vpack.c.b16 %v451, %v450
        %v462 = vpack.c.b16 %v453, %v452
        %v463 = vpack.c.b16 %v455, %v454
        %472 = vmatpush.bf16.msra.mxu0 %v463
        %473 = vmatpush.bf16.msra.mxu0 %v462
        %474 = vmatpush.bf16.msra.mxu0 %v461
        %475 = vmatpush.bf16.msra.mxu0 %v460
        %476 = vmatpush.bf16.msra.mxu0 %v459
        %477 = vmatpush.bf16.msra.mxu0 %v458
        %478 = vmatpush.bf16.msra.mxu0 %v457
        %479 = vmatpush.bf16.msra.mxu0 %v456
        %480 = vmatmul.bf16.gmra.mxu0 %v408
        %v481 = vpop.f32.mrf.mxu0
        %v482 = vadd.f32 0.0, %v481
        %v483 = vpop.f32.mrf.mxu0
        %v484 = vadd.f32 0.0, %v483
        %485 = vmatmul.bf16.gmra.mxu0 %v409
        %v486 = vpop.f32.mrf.mxu0
        %v487 = vadd.f32 0.0, %v486
        %v488 = vpop.f32.mrf.mxu0
        %v489 = vadd.f32 0.0, %v488
        %490 = vmatmul.bf16.gmra.mxu0 %v410
        %v491 = vpop.f32.mrf.mxu0
        %v492 = vadd.f32 0.0, %v491
        %v493 = vpop.f32.mrf.mxu0
        %v494 = vadd.f32 0.0, %v493
        %495 = vmatmul.bf16.gmra.mxu0 %v411
        %v496 = vpop.f32.mrf.mxu0
        %v497 = vadd.f32 0.0, %v496
        %v498 = vpop.f32.mrf.mxu0
        %v499 = vadd.f32 0.0, %v498
        %500 = vmatmul.bf16.gmra.mxu0 %v412
        %v501 = vpop.f32.mrf.mxu0
        %v502 = vadd.f32 0.0, %v501
        %v503 = vpop.f32.mrf.mxu0
        %v504 = vadd.f32 0.0, %v503
        %505 = vmatmul.bf16.gmra.mxu0 %v413
        %v506 = vpop.f32.mrf.mxu0
        %v507 = vadd.f32 0.0, %v506
        %v508 = vpop.f32.mrf.mxu0
        %v509 = vadd.f32 0.0, %v508
        %510 = vmatmul.bf16.gmra.mxu0 %v414
        %v511 = vpop.f32.mrf.mxu0
        %v512 = vadd.f32 0.0, %v511
        %v513 = vpop.f32.mrf.mxu0
        %v514 = vadd.f32 0.0, %v513
        %515 = vmatmul.bf16.gmra.mxu0 %v415
        %v516 = vpop.f32.mrf.mxu0
        %v517 = vadd.f32 0.0, %v516
        %v518 = vpop.f32.mrf.mxu0
        %v519 = vadd.f32 0.0, %v518
        %520 = vdwg.mxu0
        %v521 = vadd.f32 %v328, %v482
        %v522 = vadd.f32 %v329, %v484
        %v523 = vadd.f32 %v330, %v487
        %v524 = vadd.f32 %v331, %v489
        %v525 = vadd.f32 %v332, %v492
        %v526 = vadd.f32 %v333, %v494
        %v527 = vadd.f32 %v334, %v497
        %v528 = vadd.f32 %v335, %v499
        %v529 = vadd.f32 %v336, %v502
        %v530 = vadd.f32 %v337, %v504
        %v531 = vadd.f32 %v338, %v507
        %v532 = vadd.f32 %v339, %v509
        %v533 = vadd.f32 %v340, %v512
        %v534 = vadd.f32 %v341, %v514
        %v535 = vadd.f32 %v342, %v517
        %v536 = vadd.f32 %v343, %v519
        %537 = vst [vmem:[#allocation2] sm:$0xff] %v521
        %538 = vst [vmem:[#allocation2 + $0x8] sm:$0xff] %v522
        %539 = vst [vmem:[#allocation2 + $0x10] sm:$0xff] %v523
        %540 = vst [vmem:[#allocation2 + $0x18] sm:$0xff] %v524
        %541 = vst [vmem:[#allocation2 + $0x20] sm:$0xff] %v525
        %542 = vst [vmem:[#allocation2 + $0x28] sm:$0xff] %v526
        %543 = vst [vmem:[#allocation2 + $0x30] sm:$0xff] %v527
        %544 = vst [vmem:[#allocation2 + $0x38] sm:$0xff] %v528
        %545 = vst [vmem:[#allocation2 + $0x40] sm:$0xff] %v529
        %546 = vst [vmem:[#allocation2 + $0x48] sm:$0xff] %v530
        %547 = vst [vmem:[#allocation2 + $0x50] sm:$0xff] %v531
        %548 = vst [vmem:[#allocation2 + $0x58] sm:$0xff] %v532
        %549 = vst [vmem:[#allocation2 + $0x60] sm:$0xff] %v533
        %550 = vst [vmem:[#allocation2 + $0x68] sm:$0xff] %v534
        %551 = vst [vmem:[#allocation2 + $0x70] sm:$0xff] %v535
        %552 = vst [vmem:[#allocation2 + $0x78] sm:$0xff] %v536
        %p553 = scmp.eq.s32.totalorder %s27, 1
        // Predicated region
        $region49: #{tpu_custom_call.1} parent=39 // pred_check
          %p554 = pneg %p553
        $region50: #{tpu_custom_call.1} parent=39 // pred_check_branch
          %556 = sbr.rel (%p554) target = $region52
        $region51: #{tpu_custom_call.1} parent=39 // pred_region
          %v557 = vld [vmem:[#allocation2] sm:$0xff]
          %v558 = vld [vmem:[#allocation2 + $0x8] sm:$0xff]
          %v559 = vld [vmem:[#allocation2 + $0x10] sm:$0xff]
          %v560 = vld [vmem:[#allocation2 + $0x18] sm:$0xff]
          %v561 = vld [vmem:[#allocation2 + $0x20] sm:$0xff]
          %v562 = vld [vmem:[#allocation2 + $0x28] sm:$0xff]
          %v563 = vld [vmem:[#allocation2 + $0x30] sm:$0xff]
          %v564 = vld [vmem:[#allocation2 + $0x38] sm:$0xff]
          %v565 = vld [vmem:[#allocation2 + $0x40] sm:$0xff]
          %v566 = vld [vmem:[#allocation2 + $0x48] sm:$0xff]
          %v567 = vld [vmem:[#allocation2 + $0x50] sm:$0xff]
          %v568 = vld [vmem:[#allocation2 + $0x58] sm:$0xff]
          %v569 = vld [vmem:[#allocation2 + $0x60] sm:$0xff]
          %v570 = vld [vmem:[#allocation2 + $0x68] sm:$0xff]
          %v571 = vld [vmem:[#allocation2 + $0x70] sm:$0xff]
          %v572 = vld [vmem:[#allocation2 + $0x78] sm:$0xff]
          %v573 = vld [vmem:[%s304] sm:$0xf]
          %v574 = vld [vmem:[%s304 + $0x4] sm:$0xf]
          %v575 = vld [vmem:[%s304 + $0x8] sm:$0xf]
          %v576 = vld [vmem:[%s304 + $0xc] sm:$0xf]
          %v577 = vld [vmem:[%s304 + $0x10] sm:$0xf]
          %v578 = vld [vmem:[%s304 + $0x14] sm:$0xf]
          %v579 = vld [vmem:[%s304 + $0x18] sm:$0xf]
          %v580 = vld [vmem:[%s304 + $0x1c] sm:$0xf]
          %v581 = vld [vmem:[%s304 + $0x20] sm:$0xf]
          %v582 = vld [vmem:[%s304 + $0x24] sm:$0xf]
          %v583 = vld [vmem:[%s304 + $0x28] sm:$0xf]
          %v584 = vld [vmem:[%s304 + $0x2c] sm:$0xf]
          %v585 = vld [vmem:[%s304 + $0x30] sm:$0xf]
          %v586 = vld [vmem:[%s304 + $0x34] sm:$0xf]
          %v587 = vld [vmem:[%s304 + $0x38] sm:$0xf]
          %v588 = vld [vmem:[%s304 + $0x3c] sm:$0xf]
          %v589 = vld [vmem:[%s3] sm:$0xf]
          %v590 = vld [vmem:[%s3 + $0x4] sm:$0xf]
          %v591 = vld [vmem:[%s3 + $0x8] sm:$0xf]
          %v592 = vld [vmem:[%s3 + $0xc] sm:$0xf]
          %v609 = vunpack.c.l.b16 %v573
          %v610 = vunpack.c.l.b16 %v574
          %v611 = vunpack.c.l.b16 %v575
          %v612 = vunpack.c.l.b16 %v576
          %v613 = vunpack.c.l.b16 %v577
          %v614 = vunpack.c.l.b16 %v578
          %v615 = vunpack.c.l.b16 %v579
          %v616 = vunpack.c.l.b16 %v580
          %v617 = vunpack.c.l.b16 %v581
          %v618 = vunpack.c.l.b16 %v582
          %v619 = vunpack.c.l.b16 %v583
          %v620 = vunpack.c.l.b16 %v584
          %v621 = vunpack.c.l.b16 %v585
          %v622 = vunpack.c.l.b16 %v586
          %v623 = vunpack.c.l.b16 %v587
          %v624 = vunpack.c.l.b16 %v588
          %v625 = vpack.c.b16 %v610, %v609
          %v626 = vpack.c.b16 %v612, %v611
          %v627 = vpack.c.b16 %v614, %v613
          %v628 = vpack.c.b16 %v616, %v615
          %v629 = vpack.c.b16 %v618, %v617
          %v630 = vpack.c.b16 %v620, %v619
          %v631 = vpack.c.b16 %v622, %v621
          %v632 = vpack.c.b16 %v624, %v623
          %v637 = vunpack.c.l.b16 %v589
          %v638 = vunpack.c.l.b16 %v590
          %v639 = vunpack.c.l.b16 %v591
          %v640 = vunpack.c.l.b16 %v592
          %v641 = vpack.c.b16 %v638, %v637
          %v642 = vpack.c.b16 %v640, %v639
          %vm645 = vcmask 261120
          %v647 = vsel %vm645, %v625, 0
          %v650 = vsel %vm645, %v626, 0
          %v653 = vsel %vm645, %v627, 0
          %v656 = vsel %vm645, %v628, 0
          %v659 = vsel %vm645, %v629, 0
          %v662 = vsel %vm645, %v630, 0
          %v665 = vsel %vm645, %v631, 0
          %v668 = vsel %vm645, %v632, 0
          %670 = vmatpush.bf16.msra.mxu0 0
          %671 = vmatpush.bf16.msra.mxu0 0
          %672 = vmatpush.bf16.msra.mxu0 0
          %673 = vmatpush.bf16.msra.mxu0 0
          %674 = vmatpush.bf16.msra.mxu0 0
          %675 = vmatpush.bf16.msra.mxu0 0
          %676 = vmatpush.bf16.msra.mxu0 %v642
          %677 = vmatpush.bf16.msra.mxu0 %v641
          %678 = vmatmul.bf16.gmra.mxu0 %v647
          %v679 = vpop.f32.mrf.mxu0
          %v680 = vadd.f32 0.0, %v679
          %v681 = vpop.f32.mrf.mxu0
          %v682 = vadd.f32 0.0, %v681
          %683 = vmatmul.bf16.gmra.mxu0 %v650
          %v684 = vpop.f32.mrf.mxu0
          %v685 = vadd.f32 0.0, %v684
          %v686 = vpop.f32.mrf.mxu0
          %v687 = vadd.f32 0.0, %v686
          %688 = vmatmul.bf16.gmra.mxu0 %v653
          %v689 = vpop.f32.mrf.mxu0
          %v690 = vadd.f32 0.0, %v689
          %v691 = vpop.f32.mrf.mxu0
          %v692 = vadd.f32 0.0, %v691
          %693 = vmatmul.bf16.gmra.mxu0 %v656
          %v694 = vpop.f32.mrf.mxu0
          %v695 = vadd.f32 0.0, %v694
          %v696 = vpop.f32.mrf.mxu0
          %v697 = vadd.f32 0.0, %v696
          %698 = vmatmul.bf16.gmra.mxu0 %v659
          %v699 = vpop.f32.mrf.mxu0
          %v700 = vadd.f32 0.0, %v699
          %v701 = vpop.f32.mrf.mxu0
          %v702 = vadd.f32 0.0, %v701
          %703 = vmatmul.bf16.gmra.mxu0 %v662
          %v704 = vpop.f32.mrf.mxu0
          %v705 = vadd.f32 0.0, %v704
          %v706 = vpop.f32.mrf.mxu0
          %v707 = vadd.f32 0.0, %v706
          %708 = vmatmul.bf16.gmra.mxu0 %v665
          %v709 = vpop.f32.mrf.mxu0
          %v710 = vadd.f32 0.0, %v709
          %v711 = vpop.f32.mrf.mxu0
          %v712 = vadd.f32 0.0, %v711
          %713 = vmatmul.bf16.gmra.mxu0 %v668
          %v714 = vpop.f32.mrf.mxu0
          %v715 = vadd.f32 0.0, %v714
          %v716 = vpop.f32.mrf.mxu0
          %v717 = vadd.f32 0.0, %v716
          %718 = vdwg.mxu0
          %v719 = vadd.f32 %v557, %v680
          %v720 = vadd.f32 %v558, %v682
          %v721 = vadd.f32 %v559, %v685
          %v722 = vadd.f32 %v560, %v687
          %v723 = vadd.f32 %v561, %v690
          %v724 = vadd.f32 %v562, %v692
          %v725 = vadd.f32 %v563, %v695
          %v726 = vadd.f32 %v564, %v697
          %v727 = vadd.f32 %v565, %v700
          %v728 = vadd.f32 %v566, %v702
          %v729 = vadd.f32 %v567, %v705
          %v730 = vadd.f32 %v568, %v707
          %v731 = vadd.f32 %v569, %v710
          %v732 = vadd.f32 %v570, %v712
          %v733 = vadd.f32 %v571, %v715
          %v734 = vadd.f32 %v572, %v717
          %v735 = vld [vmem:[%s4] sm:$0x1]
          %v737 = vperm.slane %v735, 0
          %v739 = vadd.f32 %v719, %v737
          %v740 = vadd.f32 %v720, %v737
          %v741 = vadd.f32 %v721, %v737
          %v742 = vadd.f32 %v722, %v737
          %v743 = vadd.f32 %v723, %v737
          %v744 = vadd.f32 %v724, %v737
          %v745 = vadd.f32 %v725, %v737
          %v746 = vadd.f32 %v726, %v737
          %v747 = vadd.f32 %v727, %v737
          %v748 = vadd.f32 %v728, %v737
          %v749 = vadd.f32 %v729, %v737
          %v750 = vadd.f32 %v730, %v737
          %v751 = vadd.f32 %v731, %v737
          %v752 = vadd.f32 %v732, %v737
          %v753 = vadd.f32 %v733, %v737
          %v754 = vadd.f32 %v734, %v737
          %v755 = vmax.f32 %v739, 0.0
          %v756 = vmax.f32 %v740, 0.0
          %v757 = vmax.f32 %v741, 0.0
          %v758 = vmax.f32 %v742, 0.0
          %v759 = vmax.f32 %v743, 0.0
          %v760 = vmax.f32 %v744, 0.0
          %v761 = vmax.f32 %v745, 0.0
          %v762 = vmax.f32 %v746, 0.0
          %v763 = vmax.f32 %v747, 0.0
          %v764 = vmax.f32 %v748, 0.0
          %v765 = vmax.f32 %v749, 0.0
          %v766 = vmax.f32 %v750, 0.0
          %v767 = vmax.f32 %v751, 0.0
          %v768 = vmax.f32 %v752, 0.0
          %v769 = vmax.f32 %v753, 0.0
          %v770 = vmax.f32 %v754, 0.0
          %v771 = vmul.f32 %v755, %v755
          %v772 = vmul.f32 %v756, %v756
          %v773 = vmul.f32 %v757, %v757
          %v774 = vmul.f32 %v758, %v758
          %v775 = vmul.f32 %v759, %v759
          %v776 = vmul.f32 %v760, %v760
          %v777 = vmul.f32 %v761, %v761
          %v778 = vmul.f32 %v762, %v762
          %v779 = vmul.f32 %v763, %v763
          %v780 = vmul.f32 %v764, %v764
          %v781 = vmul.f32 %v765, %v765
          %v782 = vmul.f32 %v766, %v766
          %v783 = vmul.f32 %v767, %v767
          %v784 = vmul.f32 %v768, %v768
          %v785 = vmul.f32 %v769, %v769
          %v786 = vmul.f32 %v770, %v770
          %787 = vadd.xlane.f32.xlu0 %v771
          %v788 = vpop.xlane.xlu0 %787
          %789 = vadd.xlane.f32.xlu0 %v772
          %v790 = vpop.xlane.xlu0 %789
          %791 = vadd.xlane.f32.xlu0 %v773
          %v792 = vpop.xlane.xlu0 %791
          %793 = vadd.xlane.f32.xlu0 %v774
          %v794 = vpop.xlane.xlu0 %793
          %795 = vadd.xlane.f32.xlu0 %v775
          %v796 = vpop.xlane.xlu0 %795
          %797 = vadd.xlane.f32.xlu0 %v776
          %v798 = vpop.xlane.xlu0 %797
          %799 = vadd.xlane.f32.xlu0 %v777
          %v800 = vpop.xlane.xlu0 %799
          %801 = vadd.xlane.f32.xlu0 %v778
          %v802 = vpop.xlane.xlu0 %801
          %803 = vadd.xlane.f32.xlu0 %v779
          %v804 = vpop.xlane.xlu0 %803
          %805 = vadd.xlane.f32.xlu0 %v780
          %v806 = vpop.xlane.xlu0 %805
          %807 = vadd.xlane.f32.xlu0 %v781
          %v808 = vpop.xlane.xlu0 %807
          %809 = vadd.xlane.f32.xlu0 %v782
          %v810 = vpop.xlane.xlu0 %809
          %811 = vadd.xlane.f32.xlu0 %v783
          %v812 = vpop.xlane.xlu0 %811
          %813 = vadd.xlane.f32.xlu0 %v784
          %v814 = vpop.xlane.xlu0 %813
          %815 = vadd.xlane.f32.xlu0 %v785
          %v816 = vpop.xlane.xlu0 %815
          %817 = vadd.xlane.f32.xlu0 %v786
          %v818 = vpop.xlane.xlu0 %817
          %v819 = vmax.f32 %v788, 1e-24
          %v820 = vmax.f32 %v790, 1e-24
          %v821 = vmax.f32 %v792, 1e-24
          %v822 = vmax.f32 %v794, 1e-24
          %v823 = vmax.f32 %v796, 1e-24
          %v824 = vmax.f32 %v798, 1e-24
          %v825 = vmax.f32 %v800, 1e-24
          %v826 = vmax.f32 %v802, 1e-24
          %v827 = vmax.f32 %v804, 1e-24
          %v828 = vmax.f32 %v806, 1e-24
          %v829 = vmax.f32 %v808, 1e-24
          %v830 = vmax.f32 %v810, 1e-24
          %v831 = vmax.f32 %v812, 1e-24
          %v832 = vmax.f32 %v814, 1e-24
          %v833 = vmax.f32 %v816, 1e-24
          %v834 = vmax.f32 %v818, 1e-24
          %v835 = vrsqrt.pop %v819
          %v836 = vmul.f32 %v835, %v819
          %v837 = vmul.f32 %v836, %v835
          %v838 = vmul.f32 0.5, %v837
          %v839 = vsub.f32 1.5, %v838
          %v840 = vmul.f32 %v835, %v839
          %vm841 = vweird.f32 %v819
          %vm842 = vweird.f32 %v835
          %vm843 = vmor %vm841, %vm842
          %v844 = vsel %vm843, %v835, %v840
          %v845 = vrsqrt.pop %v820
          %v846 = vmul.f32 %v845, %v820
          %v847 = vmul.f32 %v846, %v845
          %v848 = vmul.f32 0.5, %v847
          %v849 = vsub.f32 1.5, %v848
          %v850 = vmul.f32 %v845, %v849
          %vm851 = vweird.f32 %v820
          %vm852 = vweird.f32 %v845
          %vm853 = vmor %vm851, %vm852
          %v854 = vsel %vm853, %v845, %v850
          %v855 = vrsqrt.pop %v821
          %v856 = vmul.f32 %v855, %v821
          %v857 = vmul.f32 %v856, %v855
          %v858 = vmul.f32 0.5, %v857
          %v859 = vsub.f32 1.5, %v858
          %v860 = vmul.f32 %v855, %v859
          %vm861 = vweird.f32 %v821
          %vm862 = vweird.f32 %v855
          %vm863 = vmor %vm861, %vm862
          %v864 = vsel %vm863, %v855, %v860
          %v865 = vrsqrt.pop %v822
          %v866 = vmul.f32 %v865, %v822
          %v867 = vmul.f32 %v866, %v865
          %v868 = vmul.f32 0.5, %v867
          %v869 = vsub.f32 1.5, %v868
          %v870 = vmul.f32 %v865, %v869
          %vm871 = vweird.f32 %v822
          %vm872 = vweird.f32 %v865
          %vm873 = vmor %vm871, %vm872
          %v874 = vsel %vm873, %v865, %v870
          %v875 = vrsqrt.pop %v823
          %v876 = vmul.f32 %v875, %v823
          %v877 = vmul.f32 %v876, %v875
          %v878 = vmul.f32 0.5, %v877
          %v879 = vsub.f32 1.5, %v878
          %v880 = vmul.f32 %v875, %v879
          %vm881 = vweird.f32 %v823
          %vm882 = vweird.f32 %v875
          %vm883 = vmor %vm881, %vm882
          %v884 = vsel %vm883, %v875, %v880
          %v885 = vrsqrt.pop %v824
          %v886 = vmul.f32 %v885, %v824
          %v887 = vmul.f32 %v886, %v885
          %v888 = vmul.f32 0.5, %v887
          %v889 = vsub.f32 1.5, %v888
          %v890 = vmul.f32 %v885, %v889
          %vm891 = vweird.f32 %v824
          %vm892 = vweird.f32 %v885
          %vm893 = vmor %vm891, %vm892
          %v894 = vsel %vm893, %v885, %v890
          %v895 = vrsqrt.pop %v825
          %v896 = vmul.f32 %v895, %v825
          %v897 = vmul.f32 %v896, %v895
          %v898 = vmul.f32 0.5, %v897
          %v899 = vsub.f32 1.5, %v898
          %v900 = vmul.f32 %v895, %v899
          %vm901 = vweird.f32 %v825
          %vm902 = vweird.f32 %v895
          %vm903 = vmor %vm901, %vm902
          %v904 = vsel %vm903, %v895, %v900
          %v905 = vrsqrt.pop %v826
          %v906 = vmul.f32 %v905, %v826
          %v907 = vmul.f32 %v906, %v905
          %v908 = vmul.f32 0.5, %v907
          %v909 = vsub.f32 1.5, %v908
          %v910 = vmul.f32 %v905, %v909
          %vm911 = vweird.f32 %v826
          %vm912 = vweird.f32 %v905
          %vm913 = vmor %vm911, %vm912
          %v914 = vsel %vm913, %v905, %v910
          %v915 = vrsqrt.pop %v827
          %v916 = vmul.f32 %v915, %v827
          %v917 = vmul.f32 %v916, %v915
          %v918 = vmul.f32 0.5, %v917
          %v919 = vsub.f32 1.5, %v918
          %v920 = vmul.f32 %v915, %v919
          %vm921 = vweird.f32 %v827
          %vm922 = vweird.f32 %v915
          %vm923 = vmor %vm921, %vm922
          %v924 = vsel %vm923, %v915, %v920
          %v925 = vrsqrt.pop %v828
          %v926 = vmul.f32 %v925, %v828
          %v927 = vmul.f32 %v926, %v925
          %v928 = vmul.f32 0.5, %v927
          %v929 = vsub.f32 1.5, %v928
          %v930 = vmul.f32 %v925, %v929
          %vm931 = vweird.f32 %v828
          %vm932 = vweird.f32 %v925
          %vm933 = vmor %vm931, %vm932
          %v934 = vsel %vm933, %v925, %v930
          %v935 = vrsqrt.pop %v829
          %v936 = vmul.f32 %v935, %v829
          %v937 = vmul.f32 %v936, %v935
          %v938 = vmul.f32 0.5, %v937
          %v939 = vsub.f32 1.5, %v938
          %v940 = vmul.f32 %v935, %v939
          %vm941 = vweird.f32 %v829
          %vm942 = vweird.f32 %v935
          %vm943 = vmor %vm941, %vm942
          %v944 = vsel %vm943, %v935, %v940
          %v945 = vrsqrt.pop %v830
          %v946 = vmul.f32 %v945, %v830
          %v947 = vmul.f32 %v946, %v945
          %v948 = vmul.f32 0.5, %v947
          %v949 = vsub.f32 1.5, %v948
          %v950 = vmul.f32 %v945, %v949
          %vm951 = vweird.f32 %v830
          %vm952 = vweird.f32 %v945
          %vm953 = vmor %vm951, %vm952
          %v954 = vsel %vm953, %v945, %v950
          %v955 = vrsqrt.pop %v831
          %v956 = vmul.f32 %v955, %v831
          %v957 = vmul.f32 %v956, %v955
          %v958 = vmul.f32 0.5, %v957
          %v959 = vsub.f32 1.5, %v958
          %v960 = vmul.f32 %v955, %v959
          %vm961 = vweird.f32 %v831
          %vm962 = vweird.f32 %v955
          %vm963 = vmor %vm961, %vm962
          %v964 = vsel %vm963, %v955, %v960
          %v965 = vrsqrt.pop %v832
          %v966 = vmul.f32 %v965, %v832
          %v967 = vmul.f32 %v966, %v965
          %v968 = vmul.f32 0.5, %v967
          %v969 = vsub.f32 1.5, %v968
          %v970 = vmul.f32 %v965, %v969
          %vm971 = vweird.f32 %v832
          %vm972 = vweird.f32 %v965
          %vm973 = vmor %vm971, %vm972
          %v974 = vsel %vm973, %v965, %v970
          %v975 = vrsqrt.pop %v833
          %v976 = vmul.f32 %v975, %v833
          %v977 = vmul.f32 %v976, %v975
          %v978 = vmul.f32 0.5, %v977
          %v979 = vsub.f32 1.5, %v978
          %v980 = vmul.f32 %v975, %v979
          %vm981 = vweird.f32 %v833
          %vm982 = vweird.f32 %v975
          %vm983 = vmor %vm981, %vm982
          %v984 = vsel %vm983, %v975, %v980
          %v985 = vrsqrt.pop %v834
          %v986 = vmul.f32 %v985, %v834
          %v987 = vmul.f32 %v986, %v985
          %v988 = vmul.f32 0.5, %v987
          %v989 = vsub.f32 1.5, %v988
          %v990 = vmul.f32 %v985, %v989
          %vm991 = vweird.f32 %v834
          %vm992 = vweird.f32 %v985
          %vm993 = vmor %vm991, %vm992
          %v994 = vsel %vm993, %v985, %v990
          %v995 = vmul.f32 %v755, %v844
          %v996 = vmul.f32 %v756, %v854
          %v997 = vmul.f32 %v757, %v864
          %v998 = vmul.f32 %v758, %v874
          %v999 = vmul.f32 %v759, %v884
          %v1000 = vmul.f32 %v760, %v894
          %v1001 = vmul.f32 %v761, %v904
          %v1002 = vmul.f32 %v762, %v914
          %v1003 = vmul.f32 %v763, %v924
          %v1004 = vmul.f32 %v764, %v934
          %v1005 = vmul.f32 %v765, %v944
          %v1006 = vmul.f32 %v766, %v954
          %v1007 = vmul.f32 %v767, %v964
          %v1008 = vmul.f32 %v768, %v974
          %v1009 = vmul.f32 %v769, %v984
          %v1010 = vmul.f32 %v770, %v994
          %v1011 = vpack.c.bf16 %v995, %v995
          %v1012 = vpack.c.bf16 %v996, %v996
          %v1013 = vpack.c.bf16 %v997, %v997
          %v1014 = vpack.c.bf16 %v998, %v998
          %v1015 = vpack.c.bf16 %v999, %v999
          %v1016 = vpack.c.bf16 %v1000, %v1000
          %v1017 = vpack.c.bf16 %v1001, %v1001
          %v1018 = vpack.c.bf16 %v1002, %v1002
          %v1019 = vpack.c.bf16 %v1003, %v1003
          %v1020 = vpack.c.bf16 %v1004, %v1004
          %v1021 = vpack.c.bf16 %v1005, %v1005
          %v1022 = vpack.c.bf16 %v1006, %v1006
          %v1023 = vpack.c.bf16 %v1007, %v1007
          %v1024 = vpack.c.bf16 %v1008, %v1008
          %v1025 = vpack.c.bf16 %v1009, %v1009
          %v1026 = vpack.c.bf16 %v1010, %v1010
          %1027 = vst [vmem:[%s292] sm:$0xf] %v1011
          %1028 = vst [vmem:[%s292 + $0x4] sm:$0xf] %v1012
          %1029 = vst [vmem:[%s292 + $0x8] sm:$0xf] %v1013
          %1030 = vst [vmem:[%s292 + $0xc] sm:$0xf] %v1014
          %1031 = vst [vmem:[%s292 + $0x10] sm:$0xf] %v1015
          %1032 = vst [vmem:[%s292 + $0x14] sm:$0xf] %v1016
          %1033 = vst [vmem:[%s292 + $0x18] sm:$0xf] %v1017
          %1034 = vst [vmem:[%s292 + $0x1c] sm:$0xf] %v1018
          %1035 = vst [vmem:[%s292 + $0x20] sm:$0xf] %v1019
          %1036 = vst [vmem:[%s292 + $0x24] sm:$0xf] %v1020
          %1037 = vst [vmem:[%s292 + $0x28] sm:$0xf] %v1021
          %1038 = vst [vmem:[%s292 + $0x2c] sm:$0xf] %v1022
          %1039 = vst [vmem:[%s292 + $0x30] sm:$0xf] %v1023
          %1040 = vst [vmem:[%s292 + $0x34] sm:$0xf] %v1024
          %1041 = vst [vmem:[%s292 + $0x38] sm:$0xf] %v1025
          %1042 = vst [vmem:[%s292 + $0x3c] sm:$0xf] %v1026
        $region52: #{tpu_custom_call.1} parent=39 // pred_fallthru
          _
        %s1043 = sand.u32 %s164, 1
        %s1044 = scalar_lea.sflag [#allocation5], %s1043
        %s1045 = sand.u32 %s164, 1
        %s1046 = smul.addr %s1045, 64
        %s1047 = scalar_lea.vmem [#allocation6], %s1046
        // Predicated region
        $region53: #{tpu_custom_call.1} parent=39 // pred_check
          %p1048 = pneg %p174
        $region54: #{tpu_custom_call.1} parent=39 // pred_check_branch
          %1050 = sbr.rel (%p1048) target = $region56
        $region55: #{tpu_custom_call.1} parent=39 // pred_region
          %s1051 = smul.u32 16, %s26
          %1053 = vsyncadd %s1044, 0
          %s1054 = smul.addr %s1051, 4
          %s1055 = scalar_lea.hbm %s5, %s1054
          %s1056 = sshll.u32 %s1047, 4
          %s1057 = int_to_ptr.vmem [resolvable:$true] %s1056
          %s1058 = sshll.u32 %s1055, 4
          %s1059 = int_to_ptr.hbm [resolvable:$true] %s1058
          %1064 = dma.vmem_to_hbm [thread:$0]  %s1057, 1024, %s1059, %s1044, 64, 64, 4
        $region56: #{tpu_custom_call.1} parent=39 // pred_fallthru
          _
      $region40: #{tpu_custom_call.1} parent=5 // pred_fallthru
        _
      %p1065 = scmp.le.s32.totalorder 2, %s17
      // Predicated region
      $region57: #{tpu_custom_call.1} parent=5 // pred_check
        %p1066 = pneg %p1065
      $region58: #{tpu_custom_call.1} parent=5 // pred_check_branch
        %1068 = sbr.rel (%p1066) target = $region60
      $region59: #{tpu_custom_call.1} parent=5 // pred_region
        %s1069 = ssub.s32 %s17, 2
        // Predicated region
        $region61: #{tpu_custom_call.1} parent=59 // pred_check
          %p1070 = pneg %p180
        $region62: #{tpu_custom_call.1} parent=59 // pred_check_branch
          %1072 = sbr.rel (%p1070) target = $region64
        $region63: #{tpu_custom_call.1} parent=59 // pred_region
          %s1073 = sand.u32 %s165, 1
          %s1074 = scalar_lea.sflag [#allocation5], %s1073
          %s1075 = sand.u32 %s165, 1
          %s1076 = smul.addr %s1075, 64
          %s1077 = scalar_lea.vmem [#allocation6], %s1076
          %1079 = dma.done %s1074, 1024
        $region64: #{tpu_custom_call.1} parent=59 // pred_fallthru
          _
      $region60: #{tpu_custom_call.1} parent=5 // pred_fallthru
        _
    $region6: #{tpu_custom_call.1} parent=1 // loop_footer
      %s21 = sadd.s32 1, %s17
    $region7: #{tpu_custom_call.1} parent=1 // loop_footer_branch
      %16 = sbr.rel target = $region3
    $region8: #{tpu_custom_call.1} parent=1 // loop_exit
      _
    %1080 = vsyncpa [#allocation4], 1
    %s1081 = scalar_lea.sflag [#allocation4], 1
    %1082 = vsyncpa %s1081, 1
    %1083 = vsyncpa [#allocation5], 1
    %s1084 = scalar_lea.sflag [#allocation5], 1
    %1085 = vsyncpa %s1084, 1

</llo_original>
